<compile_context>
chip_gen: v7x
topology: tpu7x:2x2x1
jax: 0.10.0
libtpu: 0.0.40
codegen_flags: <defaults>
</compile_context>

<pallas_src>
import numpy as np
import jax
import jax.numpy as jnp
from jax import lax
from jax.experimental import pallas as pl
from jax.experimental.pallas import tpu as pltpu

EPS = 1e-5
LANE = 128  # TPU lane width; output-channel tiles are kept lane-dense (>=128).


def _round_up(x, m):
    return (x + m - 1) // m * m


def _vmem_limit_bytes():
    # v5e/v6e have 128 MiB physical VMEM, v7x only 64 MiB; derive the scoped
    # limit from the chip with a conservative fallback.
    try:
        cap = int(pltpu.get_tpu_info().vmem_capacity_bytes)
        return int(min(cap * 3 // 4, 96 * 1024 * 1024))
    except Exception:
        return 48 * 1024 * 1024


def _pick_tile_n(cout_p):
    # 256-wide N tiles fill the 2x256x256 MXU on v6e/v7x; v5e's MXU is 128x128
    # so 128 suffices there (and whenever the padded Cout is only 128).
    if cout_p % 256 != 0:
        return 128
    try:
        kind = jax.devices()[0].device_kind.lower()
    except Exception:
        kind = ""
    if "v5 lite" in kind or "v5e" in kind:
        return 128
    return 256


# ----------------------------- Pallas kernels --------------------------------

def _make_conv3x3_kernel(row_offsets, Mo, fuse_residual):
    """Fused 3x3 conv (+ folded-BN bias) + relu6 [+ residual add + relu6].

    The three vertical taps are reduced inside the kernel: for tap kh the needed
    im2col rows are a contiguous slab (static offset row_offsets[kh]) of the
    horizontal-patch array, so each tap is a plain 2-D (Mo, 3*Cin) x (3*Cin,
    tile_n) MXU matmul with an f32 accumulator.
    """
    def kernel(*refs):
        if fuse_residual:
            p_ref, w_ref, b_ref, r_ref, o_ref = refs
        else:
            p_ref, w_ref, b_ref, o_ref = refs
        acc = None
        for kh, off in enumerate(row_offsets):
            lhs = p_ref[0, pl.ds(off, Mo), :]                 # (Mo, 3*Cin) bf16
            part = jnp.dot(lhs, w_ref[kh],                    # (3*Cin, tile_n) bf16
                           preferred_element_type=jnp.float32)
            acc = part if acc is None else acc + part
        y = jnp.clip(acc + b_ref[...], 0.0, 6.0)              # folded BN bias + relu6
        if fuse_residual:
            y = jnp.clip(r_ref[...].astype(jnp.float32) + y, 0.0, 6.0)
        o_ref[...] = y.astype(o_ref.dtype)

    return kernel


def _matmul_bias_kernel(x_ref, w_ref, b_ref, o_ref):
    # 1x1 projection conv (conv3) = matmul + bias.
    y = jnp.dot(x_ref[...], w_ref[...], preferred_element_type=jnp.float32)
    o_ref[...] = (y + b_ref[...]).astype(o_ref.dtype)


# ------------------------------- JAX glue ------------------------------------

def _tap_patches(x_nhwc, stride):
    """Horizontal-only patch extraction (3x blowup instead of im2col's 9x).

    Returns (patches, Ho, Wo, rows_per_phase) where patches has shape
    (B, stride * rows_per_phase, 3*C).  For vertical tap kh, the Ho*Wo rows at
    offset (kh % stride) * rows_per_phase + (kh // stride) * Wo are exactly that
    tap's im2col rows in (ho*Wo + wo) order.
    """
    B, H, W, C = x_nhwc.shape
    Ho = (H + 2 - 3) // stride + 1
    Wo = (W + 2 - 3) // stride + 1
    xp = jnp.pad(x_nhwc, ((0, 0), (1, 1), (1, 1), (0, 0)))
    cols = [xp[:, :, kw:kw + stride * (Wo - 1) + 1:stride, :] for kw in range(3)]
    ph = jnp.concatenate(cols, axis=-1)                        # (B, H+2, Wo, 3C)
    hq = Ho + (3 - 1) // stride                                # rows needed per phase
    phases = jnp.stack(
        [ph[:, p:p + stride * (hq - 1) + 1:stride] for p in range(stride)],
        axis=1)                                                # (B, s, hq, Wo, 3C)
    return phases.reshape(B, stride * hq * Wo, 3 * C), Ho, Wo, hq * Wo


def _prep_conv3x3_weight(w_oihw, scale, cout_p):
    """PyTorch (Cout,Cin,3,3) -> (3, 3*Cin, CoutP) bf16, BN scale folded in (f32)."""
    Cout, Cin, KH, KW = w_oihw.shape
    wm = jnp.transpose(w_oihw.astype(jnp.float32), (2, 3, 1, 0))  # (KH,KW,Cin,Cout)
    if scale is not None:
        wm = wm * scale[None, None, None, :]                      # fold BN scale (f32)
    wm = wm.reshape(KH, KW * Cin, Cout)
    wm = jnp.pad(wm, ((0, 0), (0, 0), (0, cout_p - Cout)))
    return wm.astype(jnp.bfloat16)


def _pad_row_vec(v, cout_p):
    c = v.shape[0]
    return jnp.pad(v.reshape(1, c).astype(jnp.float32), ((0, 0), (0, cout_p - c)))


def _fold_bn(gamma, beta, mean, var):
    scale = gamma / jnp.sqrt(var + EPS)
    bias = beta - mean * scale
    return scale, bias


def _conv3x3_fused(x_nhwc, w_oihw, scale, bias, stride, *, residual=None,
                   out_dtype=jnp.float32):
    """3x3 conv + BN (scale folded into W) + relu6 [+ residual add + relu6]."""
    B = x_nhwc.shape[0]
    Cin = x_nhwc.shape[3]
    Cout = w_oihw.shape[0]
    CoutP = _round_up(Cout, LANE)
    tile_n = _pick_tile_n(CoutP)

    patches, Ho, Wo, rows_per_phase = _tap_patches(x_nhwc.astype(jnp.bfloat16), stride)
    Mo = Ho * Wo                                # output rows per image
    K3 = 3 * Cin                                # per-tap contraction size
    assert Mo % 8 == 0, "Ho*Wo must be a multiple of 8 for the output BlockSpec"

    wmat = _prep_conv3x3_weight(w_oihw, scale, CoutP)
    bvec = _pad_row_vec(bias, CoutP)
    row_offsets = [(kh % stride) * rows_per_phase + (kh // stride) * Wo
                   for kh in range(3)]

    fuse_residual = residual is not None
    kernel = _make_conv3x3_kernel(row_offsets, Mo, fuse_residual)

    # grid = (batch, Cout tiles): both independent -> "parallel" (>=2 blocks so
    # v7x's two TensorCores both get work).  The patch block index depends only
    # on b, so it stays resident across the inner j axis; the small weight/bias
    # blocks are re-fetched per (b, j).
    in_specs = [
        pl.BlockSpec((1, patches.shape[1], K3), lambda b, j: (b, 0, 0)),
        pl.BlockSpec((3, K3, tile_n), lambda b, j: (0, 0, j)),
        pl.BlockSpec((1, tile_n), lambda b, j: (0, j)),
    ]
    args = [patches, wmat, bvec]
    if fuse_residual:
        in_specs.append(pl.BlockSpec((Mo, tile_n), lambda b, j: (b, j)))
        args.append(residual)

    flops = 2 * B * Mo * (9 * Cin) * CoutP
    bytes_accessed = (sum(int(a.size) * a.dtype.itemsize for a in args)
                      + B * Mo * CoutP * np.dtype(out_dtype).itemsize)

    out = pl.pallas_call(
        kernel,
        out_shape=jax.ShapeDtypeStruct((B * Mo, CoutP), out_dtype),
        grid=(B, CoutP // tile_n),
        in_specs=in_specs,
        out_specs=pl.BlockSpec((Mo, tile_n), lambda b, j: (b, j)),
        compiler_params=pltpu.CompilerParams(
            dimension_semantics=("parallel", "parallel"),
            vmem_limit_bytes=_vmem_limit_bytes()),
        cost_estimate=pl.CostEstimate(flops=int(flops), transcendentals=0,
                                      bytes_accessed=int(bytes_accessed)),
    )(*args)
    return out, Ho, Wo


def _conv1x1_proj(x2d_bf16, w_oihw, bias, rows_per_image, out_dtype=jnp.bfloat16):
    """1x1 projection conv (conv3) as a tiled matmul + bias; x2d is (B*Ho*Wo, Cin)."""
    M, Cin = x2d_bf16.shape
    B = M // rows_per_image
    Cout = w_oihw.shape[0]
    CoutP = _round_up(Cout, LANE)
    tile_n = _pick_tile_n(CoutP)
    assert rows_per_image % 8 == 0

    wmat = jnp.transpose(w_oihw[:, :, 0, 0].astype(jnp.float32), (1, 0))
    wmat = jnp.pad(wmat, ((0, 0), (0, CoutP - Cout))).astype(jnp.bfloat16)
    bvec = _pad_row_vec(bias, CoutP)

    flops = 2 * M * Cin * CoutP
    bytes_accessed = (int(x2d_bf16.size) * 2 + int(wmat.size) * 2 + int(bvec.size) * 4
                      + M * CoutP * np.dtype(out_dtype).itemsize)

    return pl.pallas_call(
        _matmul_bias_kernel,
        out_shape=jax.ShapeDtypeStruct((M, CoutP), out_dtype),
        grid=(B, CoutP // tile_n),
        in_specs=[pl.BlockSpec((rows_per_image, Cin), lambda b, j: (b, 0)),
                  pl.BlockSpec((Cin, tile_n), lambda b, j: (0, j)),
                  pl.BlockSpec((1, tile_n), lambda b, j: (0, j))],
        out_specs=pl.BlockSpec((rows_per_image, tile_n), lambda b, j: (b, j)),
        compiler_params=pltpu.CompilerParams(
            dimension_semantics=("parallel", "parallel"),
            vmem_limit_bytes=_vmem_limit_bytes()),
        cost_estimate=pl.CostEstimate(flops=int(flops), transcendentals=0,
                                      bytes_accessed=int(bytes_accessed)),
    )(x2d_bf16, wmat, bvec)


# ----------------------------- resnet_block ----------------------------------

def init_resnet_block_params(key, in_channel, out_channel, same_shape=True):
    ks = jax.random.split(key, 12)
    p = {
        "w1": jax.random.normal(ks[0], (out_channel, in_channel, 3, 3), jnp.float32) * 0.1,
        "bn1_gamma": 1.0 + 0.1 * jax.random.normal(ks[1], (out_channel,), jnp.float32),
        "bn1_beta": 0.1 * jax.random.normal(ks[2], (out_channel,), jnp.float32),
        "bn1_mean": 0.1 * jax.random.normal(ks[3], (out_channel,), jnp.float32),
        "bn1_var": jnp.abs(jax.random.normal(ks[4], (out_channel,), jnp.float32)) + 0.5,
        "w2": jax.random.normal(ks[5], (out_channel, out_channel, 3, 3), jnp.float32) * 0.1,
        "bn2_gamma": 1.0 + 0.1 * jax.random.normal(ks[6], (out_channel,), jnp.float32),
        "bn2_beta": 0.1 * jax.random.normal(ks[7], (out_channel,), jnp.float32),
        "bn2_mean": 0.1 * jax.random.normal(ks[8], (out_channel,), jnp.float32),
        "bn2_var": jnp.abs(jax.random.normal(ks[9], (out_channel,), jnp.float32)) + 0.5,
    }
    if not same_shape:
        p["w3"] = jax.random.normal(ks[10], (out_channel, in_channel, 1, 1), jnp.float32) * 0.1
        p["b3"] = 0.1 * jax.random.normal(ks[11], (out_channel,), jnp.float32)
    return p


def resnet_block_forward_nhwc(x_nhwc, params, same_shape=True):
    """NHWC forward (use this inside a network to avoid per-block transposes)."""
    stride = 1 if same_shape else 2
    B, H, W, Cin = x_nhwc.shape
    Cout = params["w1"].shape[0]
    CoutP = _round_up(Cout, LANE)
    x_nhwc = x_nhwc.astype(jnp.float32)

    s1, b1 = _fold_bn(params["bn1_gamma"], params["bn1_beta"],
                      params["bn1_mean"], params["bn1_var"])
    s2, b2 = _fold_bn(params["bn2_gamma"], params["bn2_beta"],
                      params["bn2_mean"], params["bn2_var"])

    # conv1 + bn1 + relu6 -> bf16 intermediate (halves the HBM round trip).
    out1, Ho, Wo = _conv3x3_fused(x_nhwc, params["w1"], s1, b1, stride,
                                  out_dtype=jnp.bfloat16)
    Mo = Ho * Wo

    # residual branch, kept in bf16.
    if same_shape:
        res = x_nhwc.reshape(B * H * W, Cin)               # Cin == Cout here
        res = jnp.pad(res, ((0, 0), (0, CoutP - Cin))).astype(jnp.bfloat16)
    else:
        xs = x_nhwc[:, ::stride, ::stride, :]               # 1x1 stride-2 sampling
        res = _conv1x1_proj(xs.reshape(B * Mo, Cin).astype(jnp.bfloat16),
                            params["w3"], params["b3"], Mo,
                            out_dtype=jnp.bfloat16)

    # conv2 + bn2 + relu6, then residual add + relu6, all fused (f32 output).
    out1_nhwc = out1[:, :Cout].reshape(B, Ho, Wo, Cout)
    out2, _, _ = _conv3x3_fused(out1_nhwc, params["w2"], s2, b2, 1,
                                residual=res, out_dtype=jnp.float32)
    return out2[:, :Cout].reshape(B, Ho, Wo, Cout)


def resnet_block_forward(x_nchw, params, same_shape=True):
    # NCHW wrapper to match PyTorch; transposes only at the model boundary.
    x_nhwc = jnp.transpose(x_nchw, (0, 2, 3, 1))
    out = resnet_block_forward_nhwc(x_nhwc, params, same_shape=same_shape)
    return jnp.transpose(out, (0, 3, 1, 2))


# ------------------------- pure-JAX reference (check) ------------------------

def _ref_conv(x, w, stride, pad, bias=None):
    y = lax.conv_general_dilated(x, w, (stride, stride), [(pad, pad), (pad, pad)],
                                 dimension_numbers=("NCHW", "OIHW", "NCHW"))
    if bias is not None:
        y = y + bias[None, :, None, None]
    return y


def _ref_forward(x, p, same_shape=True):
    stride = 1 if same_shape else 2
    s1, b1 = _fold_bn(p["bn1_gamma"], p["bn1_beta"], p["bn1_mean"], p["bn1_var"])
    s2, b2 = _fold_bn(p["bn2_gamma"], p["bn2_beta"], p["bn2_mean"], p["bn2_var"])
    out = _ref_conv(x, p["w1"], stride, 1)
    out = jnp.clip(out * s1[None, :, None, None] + b1[None, :, None, None], 0.0, 6.0)
    out = _ref_conv(out, p["w2"], 1, 1)
    out = jnp.clip(out * s2[None, :, None, None] + b2[None, :, None, None], 0.0, 6.0)
    res = x if same_shape else _ref_conv(x, p["w3"], stride, 0, p["b3"])
    return jnp.clip(res + out, 0.0, 6.0)


# ---------------------------------- main --------------------------------------

if __name__ == "__main__":
    key = jax.random.PRNGKey(0)
    kx, kp1, kp2 = jax.random.split(key, 3)

    # same_shape=True block: in=4, out=4, spatial 16x16, batch 2
    x = jax.random.normal(kx, (2, 4, 16, 16), jnp.float32)
    params_same = init_resnet_block_params(kp1, 4, 4, same_shape=True)
    y_same = resnet_block_forward(x, params_same, same_shape=True)
    jax.block_until_ready(y_same)
    y_same_ref = _ref_forward(x, params_same, same_shape=True)
    assert y_same.shape == (2, 4, 16, 16)
    # bf16 matmul operands / bf16 intermediates (f32 accumulate) -> loose tolerance.
    assert jnp.allclose(y_same, y_same_ref, atol=3e-2, rtol=3e-2), \
        float(jnp.max(jnp.abs(y_same - y_same_ref)))

    # same_shape=False block: in=4, out=8, stride 2 -> spatial 8x8
    params_down = init_resnet_block_params(kp2, 4, 8, same_shape=False)
    y_down = resnet_block_forward(x, params_down, same_shape=False)
    jax.block_until_ready(y_down)
    y_down_ref = _ref_forward(x, params_down, same_shape=False)
    assert y_down.shape == (2, 8, 8, 8)
    assert jnp.allclose(y_down, y_down_ref, atol=3e-2, rtol=3e-2), \
        float(jnp.max(jnp.abs(y_down - y_down_ref)))

    print("KERNEL_OK")
</pallas_src>

<mosaic_0001>
module attributes {stable_mosaic.version = 11 : i64} {
  func.func @kernel(%arg0: i32, %arg1: i32, %arg2: memref<1x288x12xbf16, #tpu.memory_space<vmem>>, %arg3: memref<3x12x128xbf16, #tpu.memory_space<vmem>>, %arg4: memref<1x128xf32, #tpu.memory_space<vmem>>, %arg5: memref<256x128xbf16, #tpu.memory_space<vmem>>) attributes {dimension_semantics = [#tpu.dimension_semantics<parallel>, #tpu.dimension_semantics<parallel>], iteration_bounds = array<i64: 2, 1>, scalar_prefetch = 0 : i64, scratch_operands = 0 : i64, tpu.core_type = #tpu.core_type<tc>, window_params = [{transform_indices = @transform_0, window_bounds = array<i64: 1, 288, 12>}, {transform_indices = @transform_1, window_bounds = array<i64: 3, 12, 128>}, {transform_indices = @transform_2, window_bounds = array<i64: 1, 128>}, {transform_indices = @transform_3, window_bounds = array<i64: 256, 128>}]} {
    %c0 = arith.constant 0 : index
    %c0_0 = arith.constant 0 : index
    %c0_1 = arith.constant 0 : index
    %0 = vector.load %arg2[%c0, %c0_0, %c0_1] : memref<1x288x12xbf16, #tpu.memory_space<vmem>>, vector<1x256x12xbf16>
    %1 = vector.shape_cast %0 : vector<1x256x12xbf16> to vector<256x12xbf16>
    %c0_2 = arith.constant 0 : index
    %c0_3 = arith.constant 0 : index
    %c0_4 = arith.constant 0 : index
    %2 = vector.load %arg3[%c0_2, %c0_3, %c0_4] : memref<3x12x128xbf16, #tpu.memory_space<vmem>>, vector<1x12x128xbf16>
    %3 = vector.shape_cast %2 : vector<1x12x128xbf16> to vector<12x128xbf16>
    %cst = arith.constant dense<0.000000e+00> : vector<256x128xf32>
    %4 = tpu.matmul %1, %3, %cst {dimension_numbers = #tpu.dot_dimension_numbers<[1], [0], [0], [1], [0, 0, 1, 1], [], []>} : vector<256x12xbf16>, vector<12x128xbf16>, vector<256x128xf32> -> vector<256x128xf32>
    %c0_5 = arith.constant 0 : index
    %c16 = arith.constant 16 : index
    %c0_6 = arith.constant 0 : index
    %5 = vector.load %arg2[%c0_5, %c16, %c0_6] : memref<1x288x12xbf16, #tpu.memory_space<vmem>>, vector<1x256x12xbf16>
    %6 = vector.shape_cast %5 : vector<1x256x12xbf16> to vector<256x12xbf16>
    %c1 = arith.constant 1 : index
    %c0_7 = arith.constant 0 : index
    %c0_8 = arith.constant 0 : index
    %7 = vector.load %arg3[%c1, %c0_7, %c0_8] : memref<3x12x128xbf16, #tpu.memory_space<vmem>>, vector<1x12x128xbf16>
    %8 = vector.shape_cast %7 : vector<1x12x128xbf16> to vector<12x128xbf16>
    %cst_9 = arith.constant dense<0.000000e+00> : vector<256x128xf32>
    %9 = tpu.matmul %6, %8, %cst_9 {dimension_numbers = #tpu.dot_dimension_numbers<[1], [0], [0], [1], [0, 0, 1, 1], [], []>} : vector<256x12xbf16>, vector<12x128xbf16>, vector<256x128xf32> -> vector<256x128xf32>
    %10 = arith.addf %4, %9 : vector<256x128xf32>
    %c0_10 = arith.constant 0 : index
    %c32 = arith.constant 32 : index
    %c0_11 = arith.constant 0 : index
    %11 = vector.load %arg2[%c0_10, %c32, %c0_11] : memref<1x288x12xbf16, #tpu.memory_space<vmem>>, vector<1x256x12xbf16>
    %12 = vector.shape_cast %11 : vector<1x256x12xbf16> to vector<256x12xbf16>
    %c2 = arith.constant 2 : index
    %c0_12 = arith.constant 0 : index
    %c0_13 = arith.constant 0 : index
    %13 = vector.load %arg3[%c2, %c0_12, %c0_13] : memref<3x12x128xbf16, #tpu.memory_space<vmem>>, vector<1x12x128xbf16>
    %14 = vector.shape_cast %13 : vector<1x12x128xbf16> to vector<12x128xbf16>
    %cst_14 = arith.constant dense<0.000000e+00> : vector<256x128xf32>
    %15 = tpu.matmul %12, %14, %cst_14 {dimension_numbers = #tpu.dot_dimension_numbers<[1], [0], [0], [1], [0, 0, 1, 1], [], []>} : vector<256x12xbf16>, vector<12x128xbf16>, vector<256x128xf32> -> vector<256x128xf32>
    %16 = arith.addf %10, %15 : vector<256x128xf32>
    %c0_15 = arith.constant 0 : index
    %c0_16 = arith.constant 0 : index
    %17 = vector.load %arg4[%c0_15, %c0_16] : memref<1x128xf32, #tpu.memory_space<vmem>>, vector<1x128xf32>
    %18 = vector.broadcast %17 : vector<1x128xf32> to vector<256x128xf32>
    %19 = arith.addf %16, %18 : vector<256x128xf32>
    %cst_17 = arith.constant 0.000000e+00 : f32
    %cst_18 = arith.constant 6.000000e+00 : f32
    %20 = vector.broadcast %cst_17 : f32 to vector<256x128xf32>
    %21 = arith.maximumf %20, %19 : vector<256x128xf32>
    %22 = vector.broadcast %cst_18 : f32 to vector<256x128xf32>
    %23 = arith.minimumf %22, %21 : vector<256x128xf32>
    %24 = arith.truncf %23 : vector<256x128xf32> to vector<256x128xbf16>
    %c0_19 = arith.constant 0 : index
    %c0_20 = arith.constant 0 : index
    %25 = vector.load %arg5[%c0_19, %c0_20] : memref<256x128xbf16, #tpu.memory_space<vmem>>, vector<256x128xbf16>
    tpu.vector_store %arg5[%c0_19, %c0_20], %24 {strides = array<i32>} : memref<256x128xbf16, #tpu.memory_space<vmem>>, vector<256x128xbf16>,
    return
  }
  func.func @transform_0(%arg0: i32, %arg1: i32) -> (i32, i32, i32) {
    %c0_i32 = arith.constant 0 : i32
    %c0_i32_0 = arith.constant 0 : i32
    %c0_i32_1 = arith.constant 0 : i32
    return %arg0, %c0_i32, %c0_i32_0 : i32, i32, i32
  }
  func.func @transform_1(%arg0: i32, %arg1: i32) -> (i32, i32, i32) {
    %c0_i32 = arith.constant 0 : i32
    %c0_i32_0 = arith.constant 0 : i32
    %c0_i32_1 = arith.constant 0 : i32
    return %c0_i32, %c0_i32_0, %arg1 : i32, i32, i32
  }
  func.func @transform_2(%arg0: i32, %arg1: i32) -> (i32, i32) {
    %c0_i32 = arith.constant 0 : i32
    %c0_i32_0 = arith.constant 0 : i32
    return %c0_i32, %arg1 : i32, i32
  }
  func.func @transform_3(%arg0: i32, %arg1: i32) -> (i32, i32) {
    %c0_i32 = arith.constant 0 : i32
    return %arg0, %arg1 : i32, i32
  }
}

</mosaic_0001>

<llo_original>
// kernel: tpu_custom_call.1
$region0: #{tpu_custom_call.1}
  #allocation0 [shape = 'u32[]', space=smem, size = 0x4, offset = 0x4, fixed_abs, tag = 'smem constant byte address 0x4 - core index']
  #allocation1 [shape = 'u32[144,128]{1,0:T(1,128)}', space=vmem, size = 0x12000, scoped, tag = 'internal scratch']
  %s0 = inlined_call_operand.vmem [shape: bf16[2,288,12], index: 0, kind: input, shape index: {}]
  %s1 = inlined_call_operand.vmem [shape: bf16[3,12,128], index: 1, kind: input, shape index: {}]
  %s2 = inlined_call_operand.vmem [shape: f32[1,128], index: 2, kind: input, shape index: {}]
  %s3 = inlined_call_operand.hbm [shape: bf16[512,128], index: 3, kind: output, shape index: {}]
  %s4 = sld [smem:[#allocation0]]
  $region45: #{tpu_custom_call.1} parent=0
    _
  %s6 = ssub.s32 1, %s4
  %s7 = scalar_select 0, %s6, %s4
  $region1: #{tpu_custom_call.1} parent=0
    #allocation2 [shape = 'u8[131072]{0}', space=vmem, size = 0x20000, scoped, tag = 'output window, operand 0']
    #allocation3 [shape = 's32[2]{0}', space=sflag, size = 0x8, scoped, tag = 'scoped memory for tpu_custom_call.1']
    %8 = vsyncpa [#allocation3], 0
    %s9 = scalar_lea.sflag [#allocation3], 1
    %10 = vsyncpa %s9, 0
    loop: start=0, step=1, limit=4
    $region2: #{tpu_custom_call.1} parent=1 // loop_pre_header
      _
    $region3: #{tpu_custom_call.1} parent=1 // loop_header
      %s12 = sphi 0, %s16
      %p13 = scmp.ge.s32.totalorder %s12, 4
      %s19 = sphi 0, %s31
      %s20 = sphi 0, %s27
      %s21 = sphi 0, %s19
      %s22 = sphi 0, %s20
      %s23 = sphi 0, %s21
      %s24 = sphi 0, %s22
      %s34 = sphi 0, %s36
      %s37 = sphi 0, %s34
      %s38 = sphi 0, %s37
      %s54 = sphi 0, %s38
      %s60 = sphi 0, %s62
      %s63 = sphi 0, %s60
      %s64 = sphi 0, %s63
      %s80 = sphi 0, %s64
      %s86 = sphi 0, %s88
      %s89 = sphi 0, %s86
      %s90 = sphi 0, %s89
      %s106 = sphi 0, %s90
      %s114 = sphi 0, %s116
      %s117 = sphi 0, %s114
      %s118 = sphi 0, %s117
      %s134 = sphi 0, %s118
    $region4: #{tpu_custom_call.1} parent=1 // loop_header_branch
      %15 = sbr.rel (%p13) target = $region8
    $region5: #{tpu_custom_call.1} parent=1 // loop_body
      %s17 = ssub.s32 %s12, 1
      %s18 = ssub.s32 %s12, 2
      %s25 = sadd.s32 1, %s20
      %p26 = scmp.ge.s32.totalorder %s25, 1
      %s27 = scalar_select %p26, 0, %s25
      %s28 = sadd.s32 1, %s19
      %s29 = scalar_select %p26, %s28, %s19
      %p30 = scmp.ge.s32.totalorder %s29, 2
      %s31 = scalar_select %p30, 0, %s29
      %s32 = ssub.s32 %s19, %s31
      %p33 = scmp.eq.s32.totalorder %s32, 0
      %s35 = sadd.s32 %s34, 1
      %s36 = scalar_select %p33, %s34, %s35
      %p39 = pneg %p33
      %p40 = scmp.eq.s32.totalorder %s12, 1
      %p41 = por %p39, %p40
      %p42 = scmp.ne.s32.totalorder %s34, %s37
      %p43 = scmp.eq.s32.totalorder %s12, 0
      %p44 = por %p42, %p43
      %p45 = scmp.ne.s32.totalorder %s34, %s37
      %p46 = scmp.eq.s32.totalorder %s17, 1
      %p47 = por %p45, %p46
      %p48 = scmp.ne.s32.totalorder %s37, %s38
      %p49 = scmp.eq.s32.totalorder %s17, 0
      %p50 = por %p48, %p49
      %p51 = scmp.ne.s32.totalorder %s37, %s38
      %p52 = scmp.eq.s32.totalorder %s18, 1
      %p53 = por %p51, %p52
      %p55 = scmp.ne.s32.totalorder %s38, %s54
      %p56 = scmp.eq.s32.totalorder %s18, 0
      %p57 = por %p55, %p56
      %s58 = ssub.s32 %s20, %s27
      %p59 = scmp.eq.s32.totalorder %s58, 0
      %s61 = sadd.s32 %s60, 1
      %s62 = scalar_select %p59, %s60, %s61
      %p65 = pneg %p59
      %p66 = scmp.eq.s32.totalorder %s12, 1
      %p67 = por %p65, %p66
      %p68 = scmp.ne.s32.totalorder %s60, %s63
      %p69 = scmp.eq.s32.totalorder %s12, 0
      %p70 = por %p68, %p69
      %p71 = scmp.ne.s32.totalorder %s60, %s63
      %p72 = scmp.eq.s32.totalorder %s17, 1
      %p73 = por %p71, %p72
      %p74 = scmp.ne.s32.totalorder %s63, %s64
      %p75 = scmp.eq.s32.totalorder %s17, 0
      %p76 = por %p74, %p75
      %p77 = scmp.ne.s32.totalorder %s63, %s64
      %p78 = scmp.eq.s32.totalorder %s18, 1
      %p79 = por %p77, %p78
      %p81 = scmp.ne.s32.totalorder %s64, %s80
      %p82 = scmp.eq.s32.totalorder %s18, 0
      %p83 = por %p81, %p82
      %s84 = ssub.s32 %s20, %s27
      %p85 = scmp.eq.s32.totalorder %s84, 0
      %s87 = sadd.s32 %s86, 1
      %s88 = scalar_select %p85, %s86, %s87
      %p91 = pneg %p85
      %p92 = scmp.eq.s32.totalorder %s12, 1
      %p93 = por %p91, %p92
      %p94 = scmp.ne.s32.totalorder %s86, %s89
      %p95 = scmp.eq.s32.totalorder %s12, 0
      %p96 = por %p94, %p95
      %p97 = scmp.ne.s32.totalorder %s86, %s89
      %p98 = scmp.eq.s32.totalorder %s17, 1
      %p99 = por %p97, %p98
      %p100 = scmp.ne.s32.totalorder %s89, %s90
      %p101 = scmp.eq.s32.totalorder %s17, 0
      %p102 = por %p100, %p101
      %p103 = scmp.ne.s32.totalorder %s89, %s90
      %p104 = scmp.eq.s32.totalorder %s18, 1
      %p105 = por %p103, %p104
      %p107 = scmp.ne.s32.totalorder %s90, %s106
      %p108 = scmp.eq.s32.totalorder %s18, 0
      %p109 = por %p107, %p108
      %s110 = ssub.s32 %s19, %s31
      %s111 = ssub.s32 %s20, %s27
      %s112 = sor.u32 %s110, %s111
      %p113 = scmp.eq.s32.totalorder %s112, 0
      %s115 = sadd.s32 %s114, 1
      %s116 = scalar_select %p113, %s114, %s115
      %p119 = pneg %p113
      %p120 = scmp.eq.s32.totalorder %s12, 1
      %p121 = por %p119, %p120
      %p122 = scmp.ne.s32.totalorder %s114, %s117
      %p123 = scmp.eq.s32.totalorder %s12, 0
      %p124 = por %p122, %p123
      %p125 = scmp.ne.s32.totalorder %s114, %s117
      %p126 = scmp.eq.s32.totalorder %s17, 1
      %p127 = por %p125, %p126
      %p128 = scmp.ne.s32.totalorder %s117, %s118
      %p129 = scmp.eq.s32.totalorder %s17, 0
      %p130 = por %p128, %p129
      %p131 = scmp.ne.s32.totalorder %s117, %s118
      %p132 = scmp.eq.s32.totalorder %s18, 1
      %p133 = por %p131, %p132
      %p135 = scmp.ne.s32.totalorder %s118, %s134
      %p136 = scmp.eq.s32.totalorder %s18, 0
      %p137 = por %p135, %p136
      %p138 = scmp.le.s32.totalorder 1, %s12
      %p139 = scmp.lt.s32.totalorder %s12, 3
      %p140 = pnand %p138, %p139
      %p141 = pneg %p140
      // Predicated region
      $region9: #{tpu_custom_call.1} parent=5 // pred_check
        _
      $region10: #{tpu_custom_call.1} parent=5 // pred_check_branch
        %143 = sbr.rel (%p140) target = $region12
      $region11: #{tpu_custom_call.1} parent=5 // pred_region
        %s144 = ssub.s32 %s12, 1
        // Predicated region
        $region13: #{tpu_custom_call.1} parent=11 // pred_check
          %p145 = pneg %p76
        $region14: #{tpu_custom_call.1} parent=11 // pred_check_branch
          %147 = sbr.rel (%p145) target = $region16
        $region15: #{tpu_custom_call.1} parent=11 // pred_region
          %p148 = scmp.lt.s32.totalorder %s22, 0
          %s149 = scalar_select %p148, %s22, 0
          %s150 = smul.addr %s149, 4
          %s151 = scalar_lea.vmem %s1, %s150
        $region16: #{tpu_custom_call.1} parent=11 // pred_fallthru
          _
        // Predicated region
        $region17: #{tpu_custom_call.1} parent=11 // pred_check
          %p152 = pneg %p102
        $region18: #{tpu_custom_call.1} parent=11 // pred_check_branch
          %154 = sbr.rel (%p152) target = $region20
        $region19: #{tpu_custom_call.1} parent=11 // pred_region
          %p155 = scmp.lt.s32.totalorder %s22, 0
          %s156 = scalar_select %p155, %s22, 0
          %s157 = scalar_lea.vmem %s2, %s156
        $region20: #{tpu_custom_call.1} parent=11 // pred_fallthru
          _
      $region12: #{tpu_custom_call.1} parent=5 // pred_fallthru
        _
      %p158 = scmp.lt.s32.totalorder %s12, 2
      // Predicated region
      $region21: #{tpu_custom_call.1} parent=5 // pred_check
        %p159 = pneg %p158
      $region22: #{tpu_custom_call.1} parent=5 // pred_check_branch
        %161 = sbr.rel (%p159) target = $region24
      $region23: #{tpu_custom_call.1} parent=5 // pred_region
        // Predicated region
        $region25: #{tpu_custom_call.1} parent=23 // pred_check
          %p162 = pneg %p44
        $region26: #{tpu_custom_call.1} parent=23 // pred_check_branch
          %164 = sbr.rel (%p162) target = $region28
        $region27: #{tpu_custom_call.1} parent=23 // pred_region
          %p165 = scmp.lt.s32.totalorder %s19, 1
          %s166 = scalar_select %p165, %s19, 1
          %s167 = smul.addr %s166, 36
          %s168 = smul.addr %s167, 4
          %s169 = scalar_lea.vmem %s0, %s168
        $region28: #{tpu_custom_call.1} parent=23 // pred_fallthru
          _
      $region24: #{tpu_custom_call.1} parent=5 // pred_fallthru
        _
      %p170 = scmp.le.s32.totalorder 1, %s12
      %p171 = scmp.lt.s32.totalorder %s12, 3
      %p172 = pnand %p170, %p171
      %p173 = pneg %p172
      // Predicated region
      $region29: #{tpu_custom_call.1} parent=5 // pred_check
        _
      $region30: #{tpu_custom_call.1} parent=5 // pred_check_branch
        %175 = sbr.rel (%p172) target = $region32
      $region31: #{tpu_custom_call.1} parent=5 // pred_region
        %s176 = ssub.s32 %s12, 1
        %p177 = scmp.lt.s32.totalorder %s21, 1
        %s178 = scalar_select %p177, %s21, 1
        %s179 = smul.addr %s178, 36
        %s180 = smul.addr %s179, 4
        %s181 = scalar_lea.vmem %s0, %s180
        %p182 = pneg %p50
        %p183 = pneg %p47
        %p184 = scmp.lt.s32.totalorder %s22, 0
        %s185 = scalar_select %p184, %s22, 0
        %s186 = smul.addr %s185, 4
        %s187 = scalar_lea.vmem %s1, %s186
        %p188 = pneg %p76
        %p189 = pneg %p73
        %p190 = scmp.lt.s32.totalorder %s22, 0
        %s191 = scalar_select %p190, %s22, 0
        %s192 = scalar_lea.vmem %s2, %s191
        %p193 = pneg %p102
        %p194 = pneg %p99
        %p195 = pneg %p130
        %p196 = pneg %p127
        %s197 = sand.u32 %s117, 1
        %s198 = scalar_lea.sflag [#allocation3], %s197
        %s199 = sand.u32 %s117, 1
        %s200 = smul.addr %s199, 128
        %s201 = scalar_lea.vmem [#allocation2], %s200
        %p202 = scmp.lt.s32.totalorder %s21, 1
        %s203 = scalar_select %p202, %s21, 1
        %s204 = smul.addr %s203, 36
        %s205 = smul.addr %s204, 4
        %s206 = scalar_lea.vmem %s0, %s205
        %p207 = scmp.lt.s32.totalorder %s22, 0
        %s208 = scalar_select %p207, %s22, 0
        %s209 = smul.addr %s208, 4
        %s210 = scalar_lea.vmem %s1, %s209
        %p211 = scmp.lt.s32.totalorder %s22, 0
        %s212 = scalar_select %p211, %s22, 0
        %s213 = scalar_lea.vmem %s2, %s212
        %s214 = smul.u32 32, %s21
        %v216 = vld [vmem:[%s206] sm:$0xf]
        %v217 = vld [vmem:[%s206 + $0x4] sm:$0xf]
        %v218 = vld [vmem:[%s206 + $0x8] sm:$0xf]
        %v219 = vld [vmem:[%s206 + $0xc] sm:$0xf]
        %v220 = vld [vmem:[%s206 + $0x10] sm:$0xf]
        %v221 = vld [vmem:[%s206 + $0x14] sm:$0xf]
        %v222 = vld [vmem:[%s206 + $0x18] sm:$0xf]
        %v223 = vld [vmem:[%s206 + $0x1c] sm:$0xf]
        %v224 = vld [vmem:[%s206 + $0x20] sm:$0xf]
        %v225 = vld [vmem:[%s206 + $0x24] sm:$0xf]
        %v226 = vld [vmem:[%s206 + $0x28] sm:$0xf]
        %v227 = vld [vmem:[%s206 + $0x2c] sm:$0xf]
        %v228 = vld [vmem:[%s206 + $0x30] sm:$0xf]
        %v229 = vld [vmem:[%s206 + $0x34] sm:$0xf]
        %v230 = vld [vmem:[%s206 + $0x38] sm:$0xf]
        %v231 = vld [vmem:[%s206 + $0x3c] sm:$0xf]
        %v232 = vld [vmem:[%s206 + $0x40] sm:$0xf]
        %v233 = vld [vmem:[%s206 + $0x44] sm:$0xf]
        %v234 = vld [vmem:[%s206 + $0x48] sm:$0xf]
        %v235 = vld [vmem:[%s206 + $0x4c] sm:$0xf]
        %v236 = vld [vmem:[%s206 + $0x50] sm:$0xf]
        %v237 = vld [vmem:[%s206 + $0x54] sm:$0xf]
        %v238 = vld [vmem:[%s206 + $0x58] sm:$0xf]
        %v239 = vld [vmem:[%s206 + $0x5c] sm:$0xf]
        %v240 = vld [vmem:[%s206 + $0x60] sm:$0xf]
        %v241 = vld [vmem:[%s206 + $0x64] sm:$0xf]
        %v242 = vld [vmem:[%s206 + $0x68] sm:$0xf]
        %v243 = vld [vmem:[%s206 + $0x6c] sm:$0xf]
        %v244 = vld [vmem:[%s206 + $0x70] sm:$0xf]
        %v245 = vld [vmem:[%s206 + $0x74] sm:$0xf]
        %v246 = vld [vmem:[%s206 + $0x78] sm:$0xf]
        %v247 = vld [vmem:[%s206 + $0x7c] sm:$0xf]
        %v248 = vld [vmem:[%s210] sm:$0xf]
        %v249 = vld [vmem:[%s210 + $0x4] sm:$0x3]
        %v250 = vld [vmem:[%s206 + $0x80] sm:$0xf]
        %v251 = vld [vmem:[%s206 + $0x84] sm:$0xf]
        %s252 = scalar_lea.vmem %s210, 8
        %v253 = vld [vmem:[%s252] sm:$0xf]
        %v254 = vld [vmem:[%s252 + $0x4] sm:$0x3]
        %v287 = vunpack.c.l.b16 %v218
        %v288 = vunpack.c.l.b16 %v219
        %v289 = vunpack.c.l.b16 %v220
        %v290 = vunpack.c.l.b16 %v221
        %v291 = vunpack.c.l.b16 %v222
        %v292 = vunpack.c.l.b16 %v223
        %v293 = vunpack.c.l.b16 %v224
        %v294 = vunpack.c.l.b16 %v225
        %v295 = vunpack.c.l.b16 %v226
        %v296 = vunpack.c.l.b16 %v227
        %v297 = vunpack.c.l.b16 %v228
        %v298 = vunpack.c.l.b16 %v229
        %v299 = vunpack.c.l.b16 %v230
        %v300 = vunpack.c.l.b16 %v231
        %v301 = vunpack.c.l.b16 %v232
        %v302 = vunpack.c.l.b16 %v233
        %v303 = vunpack.c.l.b16 %v234
        %v304 = vunpack.c.l.b16 %v235
        %v305 = vunpack.c.l.b16 %v236
        %v306 = vunpack.c.l.b16 %v237
        %v307 = vunpack.c.l.b16 %v238
        %v308 = vunpack.c.l.b16 %v239
        %v309 = vunpack.c.l.b16 %v240
        %v310 = vunpack.c.l.b16 %v241
        %v311 = vunpack.c.l.b16 %v242
        %v312 = vunpack.c.l.b16 %v243
        %v313 = vunpack.c.l.b16 %v244
        %v314 = vunpack.c.l.b16 %v245
        %v315 = vunpack.c.l.b16 %v246
        %v316 = vunpack.c.l.b16 %v247
        %v317 = vunpack.c.l.b16 %v250
        %v318 = vunpack.c.l.b16 %v251
        %v319 = vpack.c.b16 %v288, %v287
        %v320 = vpack.c.b16 %v290, %v289
        %v321 = vpack.c.b16 %v292, %v291
        %v322 = vpack.c.b16 %v294, %v293
        %v323 = vpack.c.b16 %v296, %v295
        %v324 = vpack.c.b16 %v298, %v297
        %v325 = vpack.c.b16 %v300, %v299
        %v326 = vpack.c.b16 %v302, %v301
        %v327 = vpack.c.b16 %v304, %v303
        %v328 = vpack.c.b16 %v306, %v305
        %v329 = vpack.c.b16 %v308, %v307
        %v330 = vpack.c.b16 %v310, %v309
        %v331 = vpack.c.b16 %v312, %v311
        %v332 = vpack.c.b16 %v314, %v313
        %v333 = vpack.c.b16 %v316, %v315
        %v334 = vpack.c.b16 %v318, %v317
        %v337 = vunpack.c.l.b16 %v253
        %v338 = vunpack.c.l.b16 %v254
        %v339 = vpack.c.b16 %v338, %v337
        %vm340 = vcmask 97280
        %v342 = vsel %vm340, %v319, 0
        %v345 = vsel %vm340, %v320, 0
        %v348 = vsel %vm340, %v321, 0
        %v351 = vsel %vm340, %v322, 0
        %v354 = vsel %vm340, %v323, 0
        %v357 = vsel %vm340, %v324, 0
        %v360 = vsel %vm340, %v325, 0
        %v363 = vsel %vm340, %v326, 0
        %v366 = vsel %vm340, %v327, 0
        %v369 = vsel %vm340, %v328, 0
        %v372 = vsel %vm340, %v329, 0
        %v375 = vsel %vm340, %v330, 0
        %v378 = vsel %vm340, %v331, 0
        %v381 = vsel %vm340, %v332, 0
        %v384 = vsel %vm340, %v333, 0
        %v387 = vsel %vm340, %v334, 0
        %vm389 = vcmask 1045504
        %v391 = vsel %vm389, %v339, 0
        %393 = vmatprep.subr.bf16.mxu0 0
        %394 = vmatpush1.bf16.msra.mxu0 %v391
        %395 = vmatprep.subr.bf16.mxu0 0
        %396 = vmatpush1.bf16.msra.mxu0 0
        %397 = vmatprep.subr.bf16.mxu0 0
        %398 = vmatpush1.bf16.msra.mxu0 0
        %399 = vmatprep.subr.bf16.mxu0 0
        %400 = vmatpush1.bf16.msra.mxu0 0
        %401 = vmatprep.subr.bf16.mxu0 0
        %402 = vmatpush1.bf16.msra.mxu0 0
        %403 = vmatprep.subr.bf16.mxu0 0
        %404 = vmatpush1.bf16.msra.mxu0 0
        %405 = vmatprep.subr.bf16.mxu0 0
        %406 = vmatpush1.bf16.msra.mxu0 0
        %407 = vmatprep.subr.bf16.mxu0 0
        %408 = vmatpush1.bf16.msra.mxu0 0
        %409 = vmatprep.subr.bf16.mxu0 0
        %410 = vmatpush1.bf16.msra.mxu0 0
        %411 = vmatprep.subr.bf16.mxu0 0
        %412 = vmatpush1.bf16.msra.mxu0 0
        %413 = vmatprep.subr.bf16.mxu0 0
        %414 = vmatpush1.bf16.msra.mxu0 0
        %415 = vmatprep.subr.bf16.mxu0 0
        %416 = vmatpush1.bf16.msra.mxu0 0
        %417 = vmatprep.subr.bf16.mxu0 0
        %418 = vmatpush1.bf16.msra.mxu0 0
        %419 = vmatprep.subr.bf16.mxu0 0
        %420 = vmatpush1.bf16.msra.mxu0 0
        %421 = vmatprep.subr.bf16.mxu0 0
        %422 = vmatpush1.bf16.msra.mxu0 0
        %423 = vmatprep.subr.bf16.mxu0 0
        %424 = vmatpush1.bf16.msra.mxu0 0
        %425 = vmatprep.mubr.bf16.mxu0 0
        %426 = vmatmul.mubr.bf16.gmra.mrb[0].mxu0 %v342
        %v427 = vpop.f32.mrb[0].mxu0
        %v428 = vadd.f32 0.0, %v427
        %v429 = vpop.f32.mrb[0].mxu0
        %v430 = vpop.f32.mrb[0].mxu0
        %v431 = vadd.f32 0.0, %v430
        %v432 = vpop.f32.mrb[0].mxu0
        %433 = vmatprep.mubr.bf16.mxu0 0
        %434 = vmatmul.mubr.bf16.gmra.mrb[0].mxu0 %v345
        %v435 = vpop.f32.mrb[0].mxu0
        %v436 = vadd.f32 0.0, %v435
        %v437 = vpop.f32.mrb[0].mxu0
        %v438 = vpop.f32.mrb[0].mxu0
        %v439 = vadd.f32 0.0, %v438
        %v440 = vpop.f32.mrb[0].mxu0
        %441 = vmatprep.mubr.bf16.mxu0 0
        %442 = vmatmul.mubr.bf16.gmra.mrb[0].mxu0 %v348
        %v443 = vpop.f32.mrb[0].mxu0
        %v444 = vadd.f32 0.0, %v443
        %v445 = vpop.f32.mrb[0].mxu0
        %v446 = vpop.f32.mrb[0].mxu0
        %v447 = vadd.f32 0.0, %v446
        %v448 = vpop.f32.mrb[0].mxu0
        %449 = vmatprep.mubr.bf16.mxu0 0
        %450 = vmatmul.mubr.bf16.gmra.mrb[0].mxu0 %v351
        %v451 = vpop.f32.mrb[0].mxu0
        %v452 = vadd.f32 0.0, %v451
        %v453 = vpop.f32.mrb[0].mxu0
        %v454 = vpop.f32.mrb[0].mxu0
        %v455 = vadd.f32 0.0, %v454
        %v456 = vpop.f32.mrb[0].mxu0
        %457 = vmatprep.mubr.bf16.mxu0 0
        %458 = vmatmul.mubr.bf16.gmra.mrb[0].mxu0 %v354
        %v459 = vpop.f32.mrb[0].mxu0
        %v460 = vadd.f32 0.0, %v459
        %v461 = vpop.f32.mrb[0].mxu0
        %v462 = vpop.f32.mrb[0].mxu0
        %v463 = vadd.f32 0.0, %v462
        %v464 = vpop.f32.mrb[0].mxu0
        %465 = vmatprep.mubr.bf16.mxu0 0
        %466 = vmatmul.mubr.bf16.gmra.mrb[0].mxu0 %v357
        %v467 = vpop.f32.mrb[0].mxu0
        %v468 = vadd.f32 0.0, %v467
        %v469 = vpop.f32.mrb[0].mxu0
        %v470 = vpop.f32.mrb[0].mxu0
        %v471 = vadd.f32 0.0, %v470
        %v472 = vpop.f32.mrb[0].mxu0
        %473 = vmatprep.mubr.bf16.mxu0 0
        %474 = vmatmul.mubr.bf16.gmra.mrb[0].mxu0 %v360
        %v475 = vpop.f32.mrb[0].mxu0
        %v476 = vadd.f32 0.0, %v475
        %v477 = vpop.f32.mrb[0].mxu0
        %v478 = vpop.f32.mrb[0].mxu0
        %v479 = vadd.f32 0.0, %v478
        %v480 = vpop.f32.mrb[0].mxu0
        %481 = vmatprep.mubr.bf16.mxu0 0
        %482 = vmatmul.mubr.bf16.gmra.mrb[0].mxu0 %v363
        %v483 = vpop.f32.mrb[0].mxu0
        %v484 = vadd.f32 0.0, %v483
        %v485 = vpop.f32.mrb[0].mxu0
        %v486 = vpop.f32.mrb[0].mxu0
        %v487 = vadd.f32 0.0, %v486
        %v488 = vpop.f32.mrb[0].mxu0
        %489 = vmatprep.mubr.bf16.mxu0 0
        %490 = vmatmul.mubr.bf16.gmra.mrb[0].mxu0 %v366
        %v491 = vpop.f32.mrb[0].mxu0
        %v492 = vadd.f32 0.0, %v491
        %v493 = vpop.f32.mrb[0].mxu0
        %v494 = vpop.f32.mrb[0].mxu0
        %v495 = vadd.f32 0.0, %v494
        %v496 = vpop.f32.mrb[0].mxu0
        %497 = vmatprep.mubr.bf16.mxu0 0
        %498 = vmatmul.mubr.bf16.gmra.mrb[0].mxu0 %v369
        %v499 = vpop.f32.mrb[0].mxu0
        %v500 = vadd.f32 0.0, %v499
        %v501 = vpop.f32.mrb[0].mxu0
        %v502 = vpop.f32.mrb[0].mxu0
        %v503 = vadd.f32 0.0, %v502
        %v504 = vpop.f32.mrb[0].mxu0
        %505 = vmatprep.mubr.bf16.mxu0 0
        %506 = vmatmul.mubr.bf16.gmra.mrb[0].mxu0 %v372
        %v507 = vpop.f32.mrb[0].mxu0
        %v508 = vadd.f32 0.0, %v507
        %v509 = vpop.f32.mrb[0].mxu0
        %v510 = vpop.f32.mrb[0].mxu0
        %v511 = vadd.f32 0.0, %v510
        %v512 = vpop.f32.mrb[0].mxu0
        %513 = vmatprep.mubr.bf16.mxu0 0
        %514 = vmatmul.mubr.bf16.gmra.mrb[0].mxu0 %v375
        %v515 = vpop.f32.mrb[0].mxu0
        %v516 = vadd.f32 0.0, %v515
        %v517 = vpop.f32.mrb[0].mxu0
        %v518 = vpop.f32.mrb[0].mxu0
        %v519 = vadd.f32 0.0, %v518
        %v520 = vpop.f32.mrb[0].mxu0
        %521 = vmatprep.mubr.bf16.mxu0 0
        %522 = vmatmul.mubr.bf16.gmra.mrb[0].mxu0 %v378
        %v523 = vpop.f32.mrb[0].mxu0
        %v524 = vadd.f32 0.0, %v523
        %v525 = vpop.f32.mrb[0].mxu0
        %v526 = vpop.f32.mrb[0].mxu0
        %v527 = vadd.f32 0.0, %v526
        %v528 = vpop.f32.mrb[0].mxu0
        %529 = vmatprep.mubr.bf16.mxu0 0
        %530 = vmatmul.mubr.bf16.gmra.mrb[0].mxu0 %v381
        %v531 = vpop.f32.mrb[0].mxu0
        %v532 = vadd.f32 0.0, %v531
        %v533 = vpop.f32.mrb[0].mxu0
        %v534 = vpop.f32.mrb[0].mxu0
        %v535 = vadd.f32 0.0, %v534
        %v536 = vpop.f32.mrb[0].mxu0
        %537 = vmatprep.mubr.bf16.mxu0 0
        %538 = vmatmul.mubr.bf16.gmra.mrb[0].mxu0 %v384
        %v539 = vpop.f32.mrb[0].mxu0
        %v540 = vadd.f32 0.0, %v539
        %v541 = vpop.f32.mrb[0].mxu0
        %v542 = vpop.f32.mrb[0].mxu0
        %v543 = vadd.f32 0.0, %v542
        %v544 = vpop.f32.mrb[0].mxu0
        %545 = vmatprep.mubr.bf16.mxu0 0
        %546 = vmatmul.mubr.bf16.gmra.mrb[0].mxu0 %v387
        %v547 = vpop.f32.mrb[0].mxu0
        %v548 = vadd.f32 0.0, %v547
        %v549 = vpop.f32.mrb[0].mxu0
        %v550 = vpop.f32.mrb[0].mxu0
        %v551 = vadd.f32 0.0, %v550
        %v552 = vpop.f32.mrb[0].mxu0
        %553 = vdwg.mxu0
        %v556 = vunpack.c.l.b16 %v216
        %v557 = vunpack.c.l.b16 %v217
        %v558 = vpack.c.b16 %v557, %v556
        %v561 = vunpack.c.l.b16 %v248
        %v562 = vunpack.c.l.b16 %v249
        %v563 = vpack.c.b16 %v562, %v561
        %v565 = vsel %vm340, %v558, 0
        %v568 = vsel %vm389, %v563, 0
        %570 = vmatprep.subr.bf16.mxu0 0
        %571 = vmatpush1.bf16.msra.mxu0 %v568
        %572 = vmatprep.subr.bf16.mxu0 0
        %573 = vmatpush1.bf16.msra.mxu0 0
        %574 = vmatprep.subr.bf16.mxu0 0
        %575 = vmatpush1.bf16.msra.mxu0 0
        %576 = vmatprep.subr.bf16.mxu0 0
        %577 = vmatpush1.bf16.msra.mxu0 0
        %578 = vmatprep.subr.bf16.mxu0 0
        %579 = vmatpush1.bf16.msra.mxu0 0
        %580 = vmatprep.subr.bf16.mxu0 0
        %581 = vmatpush1.bf16.msra.mxu0 0
        %582 = vmatprep.subr.bf16.mxu0 0
        %583 = vmatpush1.bf16.msra.mxu0 0
        %584 = vmatprep.subr.bf16.mxu0 0
        %585 = vmatpush1.bf16.msra.mxu0 0
        %586 = vmatprep.subr.bf16.mxu0 0
        %587 = vmatpush1.bf16.msra.mxu0 0
        %588 = vmatprep.subr.bf16.mxu0 0
        %589 = vmatpush1.bf16.msra.mxu0 0
        %590 = vmatprep.subr.bf16.mxu0 0
        %591 = vmatpush1.bf16.msra.mxu0 0
        %592 = vmatprep.subr.bf16.mxu0 0
        %593 = vmatpush1.bf16.msra.mxu0 0
        %594 = vmatprep.subr.bf16.mxu0 0
        %595 = vmatpush1.bf16.msra.mxu0 0
        %596 = vmatprep.subr.bf16.mxu0 0
        %597 = vmatpush1.bf16.msra.mxu0 0
        %598 = vmatprep.subr.bf16.mxu0 0
        %599 = vmatpush1.bf16.msra.mxu0 0
        %600 = vmatprep.subr.bf16.mxu0 0
        %601 = vmatpush1.bf16.msra.mxu0 0
        %602 = vmatprep.mubr.bf16.mxu0 0
        %603 = vmatmul.mubr.bf16.gmra.mrb[0].mxu0 %v565
        %v604 = vpop.f32.mrb[0].mxu0
        %v605 = vadd.f32 %v428, %v604
        %v606 = vpop.f32.mrb[0].mxu0
        %v607 = vpop.f32.mrb[0].mxu0
        %v608 = vadd.f32 %v431, %v607
        %v609 = vpop.f32.mrb[0].mxu0
        %610 = vmatprep.mubr.bf16.mxu0 0
        %611 = vmatmul.mubr.bf16.gmra.mrb[0].mxu0 %v342
        %v612 = vpop.f32.mrb[0].mxu0
        %v613 = vadd.f32 %v436, %v612
        %v614 = vpop.f32.mrb[0].mxu0
        %v615 = vpop.f32.mrb[0].mxu0
        %v616 = vadd.f32 %v439, %v615
        %v617 = vpop.f32.mrb[0].mxu0
        %618 = vmatprep.mubr.bf16.mxu0 0
        %619 = vmatmul.mubr.bf16.gmra.mrb[0].mxu0 %v345
        %v620 = vpop.f32.mrb[0].mxu0
        %v621 = vadd.f32 %v444, %v620
        %v622 = vpop.f32.mrb[0].mxu0
        %v623 = vpop.f32.mrb[0].mxu0
        %v624 = vadd.f32 %v447, %v623
        %v625 = vpop.f32.mrb[0].mxu0
        %626 = vmatprep.mubr.bf16.mxu0 0
        %627 = vmatmul.mubr.bf16.gmra.mrb[0].mxu0 %v348
        %v628 = vpop.f32.mrb[0].mxu0
        %v629 = vadd.f32 %v452, %v628
        %v630 = vpop.f32.mrb[0].mxu0
        %v631 = vpop.f32.mrb[0].mxu0
        %v632 = vadd.f32 %v455, %v631
        %v633 = vpop.f32.mrb[0].mxu0
        %634 = vmatprep.mubr.bf16.mxu0 0
        %635 = vmatmul.mubr.bf16.gmra.mrb[0].mxu0 %v351
        %v636 = vpop.f32.mrb[0].mxu0
        %v637 = vadd.f32 %v460, %v636
        %v638 = vpop.f32.mrb[0].mxu0
        %v639 = vpop.f32.mrb[0].mxu0
        %v640 = vadd.f32 %v463, %v639
        %v641 = vpop.f32.mrb[0].mxu0
        %642 = vmatprep.mubr.bf16.mxu0 0
        %643 = vmatmul.mubr.bf16.gmra.mrb[0].mxu0 %v354
        %v644 = vpop.f32.mrb[0].mxu0
        %v645 = vadd.f32 %v468, %v644
        %v646 = vpop.f32.mrb[0].mxu0
        %v647 = vpop.f32.mrb[0].mxu0
        %v648 = vadd.f32 %v471, %v647
        %v649 = vpop.f32.mrb[0].mxu0
        %650 = vmatprep.mubr.bf16.mxu0 0
        %651 = vmatmul.mubr.bf16.gmra.mrb[0].mxu0 %v357
        %v652 = vpop.f32.mrb[0].mxu0
        %v653 = vadd.f32 %v476, %v652
        %v654 = vpop.f32.mrb[0].mxu0
        %v655 = vpop.f32.mrb[0].mxu0
        %v656 = vadd.f32 %v479, %v655
        %v657 = vpop.f32.mrb[0].mxu0
        %658 = vmatprep.mubr.bf16.mxu0 0
        %659 = vmatmul.mubr.bf16.gmra.mrb[0].mxu0 %v360
        %v660 = vpop.f32.mrb[0].mxu0
        %v661 = vadd.f32 %v484, %v660
        %v662 = vpop.f32.mrb[0].mxu0
        %v663 = vpop.f32.mrb[0].mxu0
        %v664 = vadd.f32 %v487, %v663
        %v665 = vpop.f32.mrb[0].mxu0
        %666 = vmatprep.mubr.bf16.mxu0 0
        %667 = vmatmul.mubr.bf16.gmra.mrb[0].mxu0 %v363
        %v668 = vpop.f32.mrb[0].mxu0
        %v669 = vadd.f32 %v492, %v668
        %v670 = vpop.f32.mrb[0].mxu0
        %v671 = vpop.f32.mrb[0].mxu0
        %v672 = vadd.f32 %v495, %v671
        %v673 = vpop.f32.mrb[0].mxu0
        %674 = vmatprep.mubr.bf16.mxu0 0
        %675 = vmatmul.mubr.bf16.gmra.mrb[0].mxu0 %v366
        %v676 = vpop.f32.mrb[0].mxu0
        %v677 = vadd.f32 %v500, %v676
        %v678 = vpop.f32.mrb[0].mxu0
        %v679 = vpop.f32.mrb[0].mxu0
        %v680 = vadd.f32 %v503, %v679
        %v681 = vpop.f32.mrb[0].mxu0
        %682 = vmatprep.mubr.bf16.mxu0 0
        %683 = vmatmul.mubr.bf16.gmra.mrb[0].mxu0 %v369
        %v684 = vpop.f32.mrb[0].mxu0
        %v685 = vadd.f32 %v508, %v684
        %v686 = vpop.f32.mrb[0].mxu0
        %v687 = vpop.f32.mrb[0].mxu0
        %v688 = vadd.f32 %v511, %v687
        %v689 = vpop.f32.mrb[0].mxu0
        %690 = vmatprep.mubr.bf16.mxu0 0
        %691 = vmatmul.mubr.bf16.gmra.mrb[0].mxu0 %v372
        %v692 = vpop.f32.mrb[0].mxu0
        %v693 = vadd.f32 %v516, %v692
        %v694 = vpop.f32.mrb[0].mxu0
        %v695 = vpop.f32.mrb[0].mxu0
        %v696 = vadd.f32 %v519, %v695
        %v697 = vpop.f32.mrb[0].mxu0
        %698 = vmatprep.mubr.bf16.mxu0 0
        %699 = vmatmul.mubr.bf16.gmra.mrb[0].mxu0 %v375
        %v700 = vpop.f32.mrb[0].mxu0
        %v701 = vadd.f32 %v524, %v700
        %v702 = vpop.f32.mrb[0].mxu0
        %v703 = vpop.f32.mrb[0].mxu0
        %v704 = vadd.f32 %v527, %v703
        %v705 = vpop.f32.mrb[0].mxu0
        %706 = vmatprep.mubr.bf16.mxu0 0
        %707 = vmatmul.mubr.bf16.gmra.mrb[0].mxu0 %v378
        %v708 = vpop.f32.mrb[0].mxu0
        %v709 = vadd.f32 %v532, %v708
        %v710 = vpop.f32.mrb[0].mxu0
        %v711 = vpop.f32.mrb[0].mxu0
        %v712 = vadd.f32 %v535, %v711
        %v713 = vpop.f32.mrb[0].mxu0
        %714 = vmatprep.mubr.bf16.mxu0 0
        %715 = vmatmul.mubr.bf16.gmra.mrb[0].mxu0 %v381
        %v716 = vpop.f32.mrb[0].mxu0
        %v717 = vadd.f32 %v540, %v716
        %v718 = vpop.f32.mrb[0].mxu0
        %v719 = vpop.f32.mrb[0].mxu0
        %v720 = vadd.f32 %v543, %v719
        %v721 = vpop.f32.mrb[0].mxu0
        %722 = vmatprep.mubr.bf16.mxu0 0
        %723 = vmatmul.mubr.bf16.gmra.mrb[0].mxu0 %v384
        %v724 = vpop.f32.mrb[0].mxu0
        %v725 = vadd.f32 %v548, %v724
        %v726 = vpop.f32.mrb[0].mxu0
        %v727 = vpop.f32.mrb[0].mxu0
        %v728 = vadd.f32 %v551, %v727
        %v729 = vpop.f32.mrb[0].mxu0
        %730 = vdwg.mxu0
        %v731 = vld [vmem:[%s206 + $0x10] sm:$0xf]
        %v732 = vld [vmem:[%s206 + $0x14] sm:$0xf]
        %v733 = vld [vmem:[%s206 + $0x18] sm:$0xf]
        %v734 = vld [vmem:[%s206 + $0x1c] sm:$0xf]
        %v735 = vld [vmem:[%s206 + $0x20] sm:$0xf]
        %v736 = vld [vmem:[%s206 + $0x24] sm:$0xf]
        %v737 = vld [vmem:[%s206 + $0x28] sm:$0xf]
        %v738 = vld [vmem:[%s206 + $0x2c] sm:$0xf]
        %v739 = vld [vmem:[%s206 + $0x30] sm:$0xf]
        %v740 = vld [vmem:[%s206 + $0x34] sm:$0xf]
        %v741 = vld [vmem:[%s206 + $0x38] sm:$0xf]
        %v742 = vld [vmem:[%s206 + $0x3c] sm:$0xf]
        %v743 = vld [vmem:[%s206 + $0x40] sm:$0xf]
        %v744 = vld [vmem:[%s206 + $0x44] sm:$0xf]
        %v745 = vld [vmem:[%s206 + $0x48] sm:$0xf]
        %v746 = vld [vmem:[%s206 + $0x4c] sm:$0xf]
        %v747 = vld [vmem:[%s206 + $0x50] sm:$0xf]
        %v748 = vld [vmem:[%s206 + $0x54] sm:$0xf]
        %v749 = vld [vmem:[%s206 + $0x58] sm:$0xf]
        %v750 = vld [vmem:[%s206 + $0x5c] sm:$0xf]
        %v751 = vld [vmem:[%s206 + $0x60] sm:$0xf]
        %v752 = vld [vmem:[%s206 + $0x64] sm:$0xf]
        %v753 = vld [vmem:[%s206 + $0x68] sm:$0xf]
        %v754 = vld [vmem:[%s206 + $0x6c] sm:$0xf]
        %v755 = vld [vmem:[%s206 + $0x70] sm:$0xf]
        %v756 = vld [vmem:[%s206 + $0x74] sm:$0xf]
        %v757 = vld [vmem:[%s206 + $0x78] sm:$0xf]
        %v758 = vld [vmem:[%s206 + $0x7c] sm:$0xf]
        %v759 = vld [vmem:[%s206 + $0x80] sm:$0xf]
        %v760 = vld [vmem:[%s206 + $0x84] sm:$0xf]
        %v761 = vld [vmem:[%s206 + $0x88] sm:$0xf]
        %v762 = vld [vmem:[%s206 + $0x8c] sm:$0xf]
        %s763 = scalar_lea.vmem %s210, 16
        %v764 = vld [vmem:[%s763] sm:$0xf]
        %v765 = vld [vmem:[%s763 + $0x4] sm:$0x3]
        %v798 = vunpack.c.l.b16 %v731
        %v799 = vunpack.c.l.b16 %v732
        %v800 = vunpack.c.l.b16 %v733
        %v801 = vunpack.c.l.b16 %v734
        %v802 = vunpack.c.l.b16 %v735
        %v803 = vunpack.c.l.b16 %v736
        %v804 = vunpack.c.l.b16 %v737
        %v805 = vunpack.c.l.b16 %v738
        %v806 = vunpack.c.l.b16 %v739
        %v807 = vunpack.c.l.b16 %v740
        %v808 = vunpack.c.l.b16 %v741
        %v809 = vunpack.c.l.b16 %v742
        %v810 = vunpack.c.l.b16 %v743
        %v811 = vunpack.c.l.b16 %v744
        %v812 = vunpack.c.l.b16 %v745
        %v813 = vunpack.c.l.b16 %v746
        %v814 = vunpack.c.l.b16 %v747
        %v815 = vunpack.c.l.b16 %v748
        %v816 = vunpack.c.l.b16 %v749
        %v817 = vunpack.c.l.b16 %v750
        %v818 = vunpack.c.l.b16 %v751
        %v819 = vunpack.c.l.b16 %v752
        %v820 = vunpack.c.l.b16 %v753
        %v821 = vunpack.c.l.b16 %v754
        %v822 = vunpack.c.l.b16 %v755
        %v823 = vunpack.c.l.b16 %v756
        %v824 = vunpack.c.l.b16 %v757
        %v825 = vunpack.c.l.b16 %v758
        %v826 = vunpack.c.l.b16 %v759
        %v827 = vunpack.c.l.b16 %v760
        %v828 = vunpack.c.l.b16 %v761
        %v829 = vunpack.c.l.b16 %v762
        %v830 = vpack.c.b16 %v799, %v798
        %v831 = vpack.c.b16 %v801, %v800
        %v832 = vpack.c.b16 %v803, %v802
        %v833 = vpack.c.b16 %v805, %v804
        %v834 = vpack.c.b16 %v807, %v806
        %v835 = vpack.c.b16 %v809, %v808
        %v836 = vpack.c.b16 %v811, %v810
        %v837 = vpack.c.b16 %v813, %v812
        %v838 = vpack.c.b16 %v815, %v814
        %v839 = vpack.c.b16 %v817, %v816
        %v840 = vpack.c.b16 %v819, %v818
        %v841 = vpack.c.b16 %v821, %v820
        %v842 = vpack.c.b16 %v823, %v822
        %v843 = vpack.c.b16 %v825, %v824
        %v844 = vpack.c.b16 %v827, %v826
        %v845 = vpack.c.b16 %v829, %v828
        %v848 = vunpack.c.l.b16 %v764
        %v849 = vunpack.c.l.b16 %v765
        %v850 = vpack.c.b16 %v849, %v848
        %v852 = vsel %vm340, %v830, 0
        %v855 = vsel %vm340, %v831, 0
        %v858 = vsel %vm340, %v832, 0
        %v861 = vsel %vm340, %v833, 0
        %v864 = vsel %vm340, %v834, 0
        %v867 = vsel %vm340, %v835, 0
        %v870 = vsel %vm340, %v836, 0
        %v873 = vsel %vm340, %v837, 0
        %v876 = vsel %vm340, %v838, 0
        %v879 = vsel %vm340, %v839, 0
        %v882 = vsel %vm340, %v840, 0
        %v885 = vsel %vm340, %v841, 0
        %v888 = vsel %vm340, %v842, 0
        %v891 = vsel %vm340, %v843, 0
        %v894 = vsel %vm340, %v844, 0
        %v897 = vsel %vm340, %v845, 0
        %v900 = vsel %vm389, %v850, 0
        %902 = vmatprep.subr.bf16.mxu0 0
        %903 = vmatpush1.bf16.msra.mxu0 %v900
        %904 = vmatprep.subr.bf16.mxu0 0
        %905 = vmatpush1.bf16.msra.mxu0 0
        %906 = vmatprep.subr.bf16.mxu0 0
        %907 = vmatpush1.bf16.msra.mxu0 0
        %908 = vmatprep.subr.bf16.mxu0 0
        %909 = vmatpush1.bf16.msra.mxu0 0
        %910 = vmatprep.subr.bf16.mxu0 0
        %911 = vmatpush1.bf16.msra.mxu0 0
        %912 = vmatprep.subr.bf16.mxu0 0
        %913 = vmatpush1.bf16.msra.mxu0 0
        %914 = vmatprep.subr.bf16.mxu0 0
        %915 = vmatpush1.bf16.msra.mxu0 0
        %916 = vmatprep.subr.bf16.mxu0 0
        %917 = vmatpush1.bf16.msra.mxu0 0
        %918 = vmatprep.subr.bf16.mxu0 0
        %919 = vmatpush1.bf16.msra.mxu0 0
        %920 = vmatprep.subr.bf16.mxu0 0
        %921 = vmatpush1.bf16.msra.mxu0 0
        %922 = vmatprep.subr.bf16.mxu0 0
        %923 = vmatpush1.bf16.msra.mxu0 0
        %924 = vmatprep.subr.bf16.mxu0 0
        %925 = vmatpush1.bf16.msra.mxu0 0
        %926 = vmatprep.subr.bf16.mxu0 0
        %927 = vmatpush1.bf16.msra.mxu0 0
        %928 = vmatprep.subr.bf16.mxu0 0
        %929 = vmatpush1.bf16.msra.mxu0 0
        %930 = vmatprep.subr.bf16.mxu0 0
        %931 = vmatpush1.bf16.msra.mxu0 0
        %932 = vmatprep.subr.bf16.mxu0 0
        %933 = vmatpush1.bf16.msra.mxu0 0
        %934 = vmatprep.mubr.bf16.mxu0 0
        %935 = vmatmul.mubr.bf16.gmra.mrb[0].mxu0 %v852
        %v936 = vpop.f32.mrb[0].mxu0
        %v937 = vadd.f32 0.0, %v936
        %v938 = vpop.f32.mrb[0].mxu0
        %v939 = vpop.f32.mrb[0].mxu0
        %v940 = vadd.f32 0.0, %v939
        %v941 = vpop.f32.mrb[0].mxu0
        %942 = vmatprep.mubr.bf16.mxu0 0
        %943 = vmatmul.mubr.bf16.gmra.mrb[0].mxu0 %v855
        %v944 = vpop.f32.mrb[0].mxu0
        %v945 = vadd.f32 0.0, %v944
        %v946 = vpop.f32.mrb[0].mxu0
        %v947 = vpop.f32.mrb[0].mxu0
        %v948 = vadd.f32 0.0, %v947
        %v949 = vpop.f32.mrb[0].mxu0
        %950 = vmatprep.mubr.bf16.mxu0 0
        %951 = vmatmul.mubr.bf16.gmra.mrb[0].mxu0 %v858
        %v952 = vpop.f32.mrb[0].mxu0
        %v953 = vadd.f32 0.0, %v952
        %v954 = vpop.f32.mrb[0].mxu0
        %v955 = vpop.f32.mrb[0].mxu0
        %v956 = vadd.f32 0.0, %v955
        %v957 = vpop.f32.mrb[0].mxu0
        %958 = vmatprep.mubr.bf16.mxu0 0
        %959 = vmatmul.mubr.bf16.gmra.mrb[0].mxu0 %v861
        %v960 = vpop.f32.mrb[0].mxu0
        %v961 = vadd.f32 0.0, %v960
        %v962 = vpop.f32.mrb[0].mxu0
        %v963 = vpop.f32.mrb[0].mxu0
        %v964 = vadd.f32 0.0, %v963
        %v965 = vpop.f32.mrb[0].mxu0
        %966 = vmatprep.mubr.bf16.mxu0 0
        %967 = vmatmul.mubr.bf16.gmra.mrb[0].mxu0 %v864
        %v968 = vpop.f32.mrb[0].mxu0
        %v969 = vadd.f32 0.0, %v968
        %v970 = vpop.f32.mrb[0].mxu0
        %v971 = vpop.f32.mrb[0].mxu0
        %v972 = vadd.f32 0.0, %v971
        %v973 = vpop.f32.mrb[0].mxu0
        %974 = vmatprep.mubr.bf16.mxu0 0
        %975 = vmatmul.mubr.bf16.gmra.mrb[0].mxu0 %v867
        %v976 = vpop.f32.mrb[0].mxu0
        %v977 = vadd.f32 0.0, %v976
        %v978 = vpop.f32.mrb[0].mxu0
        %v979 = vpop.f32.mrb[0].mxu0
        %v980 = vadd.f32 0.0, %v979
        %v981 = vpop.f32.mrb[0].mxu0
        %982 = vmatprep.mubr.bf16.mxu0 0
        %983 = vmatmul.mubr.bf16.gmra.mrb[0].mxu0 %v870
        %v984 = vpop.f32.mrb[0].mxu0
        %v985 = vadd.f32 0.0, %v984
        %v986 = vpop.f32.mrb[0].mxu0
        %v987 = vpop.f32.mrb[0].mxu0
        %v988 = vadd.f32 0.0, %v987
        %v989 = vpop.f32.mrb[0].mxu0
        %990 = vmatprep.mubr.bf16.mxu0 0
        %991 = vmatmul.mubr.bf16.gmra.mrb[0].mxu0 %v873
        %v992 = vpop.f32.mrb[0].mxu0
        %v993 = vadd.f32 0.0, %v992
        %v994 = vpop.f32.mrb[0].mxu0
        %v995 = vpop.f32.mrb[0].mxu0
        %v996 = vadd.f32 0.0, %v995
        %v997 = vpop.f32.mrb[0].mxu0
        %998 = vmatprep.mubr.bf16.mxu0 0
        %999 = vmatmul.mubr.bf16.gmra.mrb[0].mxu0 %v876
        %v1000 = vpop.f32.mrb[0].mxu0
        %v1001 = vadd.f32 0.0, %v1000
        %v1002 = vpop.f32.mrb[0].mxu0
        %v1003 = vpop.f32.mrb[0].mxu0
        %v1004 = vadd.f32 0.0, %v1003
        %v1005 = vpop.f32.mrb[0].mxu0
        %1006 = vmatprep.mubr.bf16.mxu0 0
        %1007 = vmatmul.mubr.bf16.gmra.mrb[0].mxu0 %v879
        %v1008 = vpop.f32.mrb[0].mxu0
        %v1009 = vadd.f32 0.0, %v1008
        %v1010 = vpop.f32.mrb[0].mxu0
        %v1011 = vpop.f32.mrb[0].mxu0
        %v1012 = vadd.f32 0.0, %v1011
        %v1013 = vpop.f32.mrb[0].mxu0
        %1014 = vmatprep.mubr.bf16.mxu0 0
        %1015 = vmatmul.mubr.bf16.gmra.mrb[0].mxu0 %v882
        %v1016 = vpop.f32.mrb[0].mxu0
        %v1017 = vadd.f32 0.0, %v1016
        %v1018 = vpop.f32.mrb[0].mxu0
        %v1019 = vpop.f32.mrb[0].mxu0
        %v1020 = vadd.f32 0.0, %v1019
        %v1021 = vpop.f32.mrb[0].mxu0
        %1022 = vmatprep.mubr.bf16.mxu0 0
        %1023 = vmatmul.mubr.bf16.gmra.mrb[0].mxu0 %v885
        %v1024 = vpop.f32.mrb[0].mxu0
        %v1025 = vadd.f32 0.0, %v1024
        %v1026 = vpop.f32.mrb[0].mxu0
        %v1027 = vpop.f32.mrb[0].mxu0
        %v1028 = vadd.f32 0.0, %v1027
        %v1029 = vpop.f32.mrb[0].mxu0
        %1030 = vmatprep.mubr.bf16.mxu0 0
        %1031 = vmatmul.mubr.bf16.gmra.mrb[0].mxu0 %v888
        %v1032 = vpop.f32.mrb[0].mxu0
        %v1033 = vadd.f32 0.0, %v1032
        %v1034 = vpop.f32.mrb[0].mxu0
        %v1035 = vpop.f32.mrb[0].mxu0
        %v1036 = vadd.f32 0.0, %v1035
        %v1037 = vpop.f32.mrb[0].mxu0
        %1038 = vmatprep.mubr.bf16.mxu0 0
        %1039 = vmatmul.mubr.bf16.gmra.mrb[0].mxu0 %v891
        %v1040 = vpop.f32.mrb[0].mxu0
        %v1041 = vadd.f32 0.0, %v1040
        %v1042 = vpop.f32.mrb[0].mxu0
        %v1043 = vpop.f32.mrb[0].mxu0
        %v1044 = vadd.f32 0.0, %v1043
        %v1045 = vpop.f32.mrb[0].mxu0
        %1046 = vmatprep.mubr.bf16.mxu0 0
        %1047 = vmatmul.mubr.bf16.gmra.mrb[0].mxu0 %v894
        %v1048 = vpop.f32.mrb[0].mxu0
        %v1049 = vadd.f32 0.0, %v1048
        %v1050 = vpop.f32.mrb[0].mxu0
        %v1051 = vpop.f32.mrb[0].mxu0
        %v1052 = vadd.f32 0.0, %v1051
        %v1053 = vpop.f32.mrb[0].mxu0
        %1054 = vmatprep.mubr.bf16.mxu0 0
        %1055 = vmatmul.mubr.bf16.gmra.mrb[0].mxu0 %v897
        %v1056 = vpop.f32.mrb[0].mxu0
        %v1057 = vadd.f32 0.0, %v1056
        %v1058 = vpop.f32.mrb[0].mxu0
        %v1059 = vpop.f32.mrb[0].mxu0
        %v1060 = vadd.f32 0.0, %v1059
        %v1061 = vpop.f32.mrb[0].mxu0
        %1062 = vdwg.mxu0
        %v1063 = vadd.f32 %v605, %v937
        %v1064 = vadd.f32 %v608, %v940
        %v1065 = vadd.f32 %v613, %v945
        %v1066 = vadd.f32 %v616, %v948
        %v1067 = vadd.f32 %v621, %v953
        %v1068 = vadd.f32 %v624, %v956
        %v1069 = vadd.f32 %v629, %v961
        %v1070 = vadd.f32 %v632, %v964
        %v1071 = vadd.f32 %v637, %v969
        %v1072 = vadd.f32 %v640, %v972
        %v1073 = vadd.f32 %v645, %v977
        %v1074 = vadd.f32 %v648, %v980
        %v1075 = vadd.f32 %v653, %v985
        %v1076 = vadd.f32 %v656, %v988
        %v1077 = vadd.f32 %v661, %v993
        %v1078 = vadd.f32 %v664, %v996
        %v1079 = vadd.f32 %v669, %v1001
        %v1080 = vadd.f32 %v672, %v1004
        %v1081 = vadd.f32 %v677, %v1009
        %v1082 = vadd.f32 %v680, %v1012
        %v1083 = vadd.f32 %v685, %v1017
        %v1084 = vadd.f32 %v688, %v1020
        %v1085 = vadd.f32 %v693, %v1025
        %v1086 = vadd.f32 %v696, %v1028
        %v1087 = vadd.f32 %v701, %v1033
        %v1088 = vadd.f32 %v704, %v1036
        %v1089 = vadd.f32 %v709, %v1041
        %v1090 = vadd.f32 %v712, %v1044
        %v1091 = vadd.f32 %v717, %v1049
        %v1092 = vadd.f32 %v720, %v1052
        %v1093 = vadd.f32 %v725, %v1057
        %v1094 = vadd.f32 %v728, %v1060
        %v1095 = vld [vmem:[%s213] sm:$0x1]
        %v1097 = vlaneseq
        %v1098 = vshrl.u32 %v1097, 7
        %v1099 = vsub.s32 0, %v1098
        %v1100 = vrot.slane %v1095, %v1099
        %v1102 = vadd.f32 %v1063, %v1100
        %v1103 = vadd.f32 %v1064, %v1100
        %v1104 = vadd.f32 %v1065, %v1100
        %v1105 = vadd.f32 %v1066, %v1100
        %v1106 = vadd.f32 %v1067, %v1100
        %v1107 = vadd.f32 %v1068, %v1100
        %v1108 = vadd.f32 %v1069, %v1100
        %v1109 = vadd.f32 %v1070, %v1100
        %v1110 = vadd.f32 %v1071, %v1100
        %v1111 = vadd.f32 %v1072, %v1100
        %v1112 = vadd.f32 %v1073, %v1100
        %v1113 = vadd.f32 %v1074, %v1100
        %v1114 = vadd.f32 %v1075, %v1100
        %v1115 = vadd.f32 %v1076, %v1100
        %v1116 = vadd.f32 %v1077, %v1100
        %v1117 = vadd.f32 %v1078, %v1100
        %v1118 = vadd.f32 %v1079, %v1100
        %v1119 = vadd.f32 %v1080, %v1100
        %v1120 = vadd.f32 %v1081, %v1100
        %v1121 = vadd.f32 %v1082, %v1100
        %v1122 = vadd.f32 %v1083, %v1100
        %v1123 = vadd.f32 %v1084, %v1100
        %v1124 = vadd.f32 %v1085, %v1100
        %v1125 = vadd.f32 %v1086, %v1100
        %v1126 = vadd.f32 %v1087, %v1100
        %v1127 = vadd.f32 %v1088, %v1100
        %v1128 = vadd.f32 %v1089, %v1100
        %v1129 = vadd.f32 %v1090, %v1100
        %v1130 = vadd.f32 %v1091, %v1100
        %v1131 = vadd.f32 %v1092, %v1100
        %v1132 = vadd.f32 %v1093, %v1100
        %v1133 = vadd.f32 %v1094, %v1100
        %v1134 = vmax.f32 %v1102, 0.0
        %v1135 = vmax.f32 %v1103, 0.0
        %v1136 = vmax.f32 %v1104, 0.0
        %v1137 = vmax.f32 %v1105, 0.0
        %v1138 = vmax.f32 %v1106, 0.0
        %v1139 = vmax.f32 %v1107, 0.0
        %v1140 = vmax.f32 %v1108, 0.0
        %v1141 = vmax.f32 %v1109, 0.0
        %v1142 = vmax.f32 %v1110, 0.0
        %v1143 = vmax.f32 %v1111, 0.0
        %v1144 = vmax.f32 %v1112, 0.0
        %v1145 = vmax.f32 %v1113, 0.0
        %v1146 = vmax.f32 %v1114, 0.0
        %v1147 = vmax.f32 %v1115, 0.0
        %v1148 = vmax.f32 %v1116, 0.0
        %v1149 = vmax.f32 %v1117, 0.0
        %v1150 = vmax.f32 %v1118, 0.0
        %v1151 = vmax.f32 %v1119, 0.0
        %v1152 = vmax.f32 %v1120, 0.0
        %v1153 = vmax.f32 %v1121, 0.0
        %v1154 = vmax.f32 %v1122, 0.0
        %v1155 = vmax.f32 %v1123, 0.0
        %v1156 = vmax.f32 %v1124, 0.0
        %v1157 = vmax.f32 %v1125, 0.0
        %v1158 = vmax.f32 %v1126, 0.0
        %v1159 = vmax.f32 %v1127, 0.0
        %v1160 = vmax.f32 %v1128, 0.0
        %v1161 = vmax.f32 %v1129, 0.0
        %v1162 = vmax.f32 %v1130, 0.0
        %v1163 = vmax.f32 %v1131, 0.0
        %v1164 = vmax.f32 %v1132, 0.0
        %v1165 = vmax.f32 %v1133, 0.0
        %v1166 = vmin.f32 %v1134, 6.0
        %v1167 = vmin.f32 %v1135, 6.0
        %v1168 = vmin.f32 %v1136, 6.0
        %v1169 = vmin.f32 %v1137, 6.0
        %v1170 = vmin.f32 %v1138, 6.0
        %v1171 = vmin.f32 %v1139, 6.0
        %v1172 = vmin.f32 %v1140, 6.0
        %v1173 = vmin.f32 %v1141, 6.0
        %v1174 = vmin.f32 %v1142, 6.0
        %v1175 = vmin.f32 %v1143, 6.0
        %v1176 = vmin.f32 %v1144, 6.0
        %v1177 = vmin.f32 %v1145, 6.0
        %v1178 = vmin.f32 %v1146, 6.0
        %v1179 = vmin.f32 %v1147, 6.0
        %v1180 = vmin.f32 %v1148, 6.0
        %v1181 = vmin.f32 %v1149, 6.0
        %v1182 = vmin.f32 %v1150, 6.0
        %v1183 = vmin.f32 %v1151, 6.0
        %v1184 = vmin.f32 %v1152, 6.0
        %v1185 = vmin.f32 %v1153, 6.0
        %v1186 = vmin.f32 %v1154, 6.0
        %v1187 = vmin.f32 %v1155, 6.0
        %v1188 = vmin.f32 %v1156, 6.0
        %v1189 = vmin.f32 %v1157, 6.0
        %v1190 = vmin.f32 %v1158, 6.0
        %v1191 = vmin.f32 %v1159, 6.0
        %v1192 = vmin.f32 %v1160, 6.0
        %v1193 = vmin.f32 %v1161, 6.0
        %v1194 = vmin.f32 %v1162, 6.0
        %v1195 = vmin.f32 %v1163, 6.0
        %v1196 = vmin.f32 %v1164, 6.0
        %v1197 = vmin.f32 %v1165, 6.0
        %v1198 = vpack.c.bf16 %v1167, %v1166
        %v1199 = vpack.c.bf16 %v1169, %v1168
        %v1200 = vpack.c.bf16 %v1171, %v1170
        %v1201 = vpack.c.bf16 %v1173, %v1172
        %v1202 = vpack.c.bf16 %v1175, %v1174
        %v1203 = vpack.c.bf16 %v1177, %v1176
        %v1204 = vpack.c.bf16 %v1179, %v1178
        %v1205 = vpack.c.bf16 %v1181, %v1180
        %v1206 = vpack.c.bf16 %v1183, %v1182
        %v1207 = vpack.c.bf16 %v1185, %v1184
        %v1208 = vpack.c.bf16 %v1187, %v1186
        %v1209 = vpack.c.bf16 %v1189, %v1188
        %v1210 = vpack.c.bf16 %v1191, %v1190
        %v1211 = vpack.c.bf16 %v1193, %v1192
        %v1212 = vpack.c.bf16 %v1195, %v1194
        %v1213 = vpack.c.bf16 %v1197, %v1196
        %v1230 = vunpack.c.l.b16 %v1198
        %v1231 = vunpack.c.h.b16 %v1198
        %v1232 = vunpack.c.l.b16 %v1199
        %v1233 = vunpack.c.h.b16 %v1199
        %v1234 = vunpack.c.l.b16 %v1200
        %v1235 = vunpack.c.h.b16 %v1200
        %v1236 = vunpack.c.l.b16 %v1201
        %v1237 = vunpack.c.h.b16 %v1201
        %v1238 = vunpack.c.l.b16 %v1202
        %v1239 = vunpack.c.h.b16 %v1202
        %v1240 = vunpack.c.l.b16 %v1203
        %v1241 = vunpack.c.h.b16 %v1203
        %v1242 = vunpack.c.l.b16 %v1204
        %v1243 = vunpack.c.h.b16 %v1204
        %v1244 = vunpack.c.l.b16 %v1205
        %v1245 = vunpack.c.h.b16 %v1205
        %v1246 = vunpack.c.l.b16 %v1206
        %v1247 = vunpack.c.h.b16 %v1206
        %v1248 = vunpack.c.l.b16 %v1207
        %v1249 = vunpack.c.h.b16 %v1207
        %v1250 = vunpack.c.l.b16 %v1208
        %v1251 = vunpack.c.h.b16 %v1208
        %v1252 = vunpack.c.l.b16 %v1209
        %v1253 = vunpack.c.h.b16 %v1209
        %v1254 = vunpack.c.l.b16 %v1210
        %v1255 = vunpack.c.h.b16 %v1210
        %v1256 = vunpack.c.l.b16 %v1211
        %v1257 = vunpack.c.h.b16 %v1211
        %v1258 = vunpack.c.l.b16 %v1212
        %v1259 = vunpack.c.h.b16 %v1212
        %v1260 = vunpack.c.l.b16 %v1213
        %v1261 = vunpack.c.h.b16 %v1213
        %v1262 = vpack.c.b16 %v1230, %v1230
        %v1263 = vpack.c.b16 %v1231, %v1231
        %v1264 = vpack.c.b16 %v1232, %v1232
        %v1265 = vpack.c.b16 %v1233, %v1233
        %v1266 = vpack.c.b16 %v1234, %v1234
        %v1267 = vpack.c.b16 %v1235, %v1235
        %v1268 = vpack.c.b16 %v1236, %v1236
        %v1269 = vpack.c.b16 %v1237, %v1237
        %v1270 = vpack.c.b16 %v1238, %v1238
        %v1271 = vpack.c.b16 %v1239, %v1239
        %v1272 = vpack.c.b16 %v1240, %v1240
        %v1273 = vpack.c.b16 %v1241, %v1241
        %v1274 = vpack.c.b16 %v1242, %v1242
        %v1275 = vpack.c.b16 %v1243, %v1243
        %v1276 = vpack.c.b16 %v1244, %v1244
        %v1277 = vpack.c.b16 %v1245, %v1245
        %v1278 = vpack.c.b16 %v1246, %v1246
        %v1279 = vpack.c.b16 %v1247, %v1247
        %v1280 = vpack.c.b16 %v1248, %v1248
        %v1281 = vpack.c.b16 %v1249, %v1249
        %v1282 = vpack.c.b16 %v1250, %v1250
        %v1283 = vpack.c.b16 %v1251, %v1251
        %v1284 = vpack.c.b16 %v1252, %v1252
        %v1285 = vpack.c.b16 %v1253, %v1253
        %v1286 = vpack.c.b16 %v1254, %v1254
        %v1287 = vpack.c.b16 %v1255, %v1255
        %v1288 = vpack.c.b16 %v1256, %v1256
        %v1289 = vpack.c.b16 %v1257, %v1257
        %v1290 = vpack.c.b16 %v1258, %v1258
        %v1291 = vpack.c.b16 %v1259, %v1259
        %v1292 = vpack.c.b16 %v1260, %v1260
        %v1293 = vpack.c.b16 %v1261, %v1261
        %1326 = vst [vmem:[%s201] sm:$0xf] %v1262
        %1327 = vst [vmem:[%s201 + $0x4] sm:$0xf] %v1263
        %1328 = vst [vmem:[%s201 + $0x8] sm:$0xf] %v1264
        %1329 = vst [vmem:[%s201 + $0xc] sm:$0xf] %v1265
        %1330 = vst [vmem:[%s201 + $0x10] sm:$0xf] %v1266
        %1331 = vst [vmem:[%s201 + $0x14] sm:$0xf] %v1267
        %1332 = vst [vmem:[%s201 + $0x18] sm:$0xf] %v1268
        %1333 = vst [vmem:[%s201 + $0x1c] sm:$0xf] %v1269
        %1334 = vst [vmem:[%s201 + $0x20] sm:$0xf] %v1270
        %1335 = vst [vmem:[%s201 + $0x24] sm:$0xf] %v1271
        %1336 = vst [vmem:[%s201 + $0x28] sm:$0xf] %v1272
        %1337 = vst [vmem:[%s201 + $0x2c] sm:$0xf] %v1273
        %1338 = vst [vmem:[%s201 + $0x30] sm:$0xf] %v1274
        %1339 = vst [vmem:[%s201 + $0x34] sm:$0xf] %v1275
        %1340 = vst [vmem:[%s201 + $0x38] sm:$0xf] %v1276
        %1341 = vst [vmem:[%s201 + $0x3c] sm:$0xf] %v1277
        %1342 = vst [vmem:[%s201 + $0x40] sm:$0xf] %v1278
        %1343 = vst [vmem:[%s201 + $0x44] sm:$0xf] %v1279
        %1344 = vst [vmem:[%s201 + $0x48] sm:$0xf] %v1280
        %1345 = vst [vmem:[%s201 + $0x4c] sm:$0xf] %v1281
        %1346 = vst [vmem:[%s201 + $0x50] sm:$0xf] %v1282
        %1347 = vst [vmem:[%s201 + $0x54] sm:$0xf] %v1283
        %1348 = vst [vmem:[%s201 + $0x58] sm:$0xf] %v1284
        %1349 = vst [vmem:[%s201 + $0x5c] sm:$0xf] %v1285
        %1350 = vst [vmem:[%s201 + $0x60] sm:$0xf] %v1286
        %1351 = vst [vmem:[%s201 + $0x64] sm:$0xf] %v1287
        %1352 = vst [vmem:[%s201 + $0x68] sm:$0xf] %v1288
        %1353 = vst [vmem:[%s201 + $0x6c] sm:$0xf] %v1289
        %1354 = vst [vmem:[%s201 + $0x70] sm:$0xf] %v1290
        %1355 = vst [vmem:[%s201 + $0x74] sm:$0xf] %v1291
        %1356 = vst [vmem:[%s201 + $0x78] sm:$0xf] %v1292
        %1357 = vst [vmem:[%s201 + $0x7c] sm:$0xf] %v1293
        %s1358 = sand.u32 %s117, 1
        %s1359 = scalar_lea.sflag [#allocation3], %s1358
        %s1360 = sand.u32 %s117, 1
        %s1361 = smul.addr %s1360, 128
        %s1362 = scalar_lea.vmem [#allocation2], %s1361
        // Predicated region
        $region33: #{tpu_custom_call.1} parent=31 // pred_check
          %p1363 = pneg %p127
        $region34: #{tpu_custom_call.1} parent=31 // pred_check_branch
          %1365 = sbr.rel (%p1363) target = $region36
        $region35: #{tpu_custom_call.1} parent=31 // pred_region
          %s1366 = smul.u32 32, %s21
          %s1368 = ssub.s32 2048, 2048
          %1369 = vsyncadd %s1359, %s1368
          %s1370 = sadd.s32 %s22, %s1366
          %s1371 = smul.addr %s1370, 64
          %s1372 = scalar_lea.hbm %s3, %s1371
          %s1373 = sshll.u32 %s1362, 4
          %s1374 = int_to_ptr.vmem [resolvable:$true] %s1373
          %1379 = dma.vmem_to_hbm [thread:$0]  %s1374, 2048, %s1372, %s1359, 64, 64, 4
        $region36: #{tpu_custom_call.1} parent=31 // pred_fallthru
          _
      $region32: #{tpu_custom_call.1} parent=5 // pred_fallthru
        _
      %p1380 = scmp.le.s32.totalorder 2, %s12
      // Predicated region
      $region37: #{tpu_custom_call.1} parent=5 // pred_check
        %p1381 = pneg %p1380
      $region38: #{tpu_custom_call.1} parent=5 // pred_check_branch
        %1383 = sbr.rel (%p1381) target = $region40
      $region39: #{tpu_custom_call.1} parent=5 // pred_region
        %s1384 = ssub.s32 %s12, 2
        // Predicated region
        $region41: #{tpu_custom_call.1} parent=39 // pred_check
          %p1385 = pneg %p133
        $region42: #{tpu_custom_call.1} parent=39 // pred_check_branch
          %1387 = sbr.rel (%p1385) target = $region44
        $region43: #{tpu_custom_call.1} parent=39 // pred_region
          %s1388 = sand.u32 %s118, 1
          %s1389 = scalar_lea.sflag [#allocation3], %s1388
          %s1390 = sand.u32 %s118, 1
          %s1391 = smul.addr %s1390, 128
          %s1392 = scalar_lea.vmem [#allocation2], %s1391
          %1393 = dma.done %s1389, 2048
        $region44: #{tpu_custom_call.1} parent=39 // pred_fallthru
          _
      $region40: #{tpu_custom_call.1} parent=5 // pred_fallthru
        _
    $region6: #{tpu_custom_call.1} parent=1 // loop_footer
      %s16 = sadd.s32 1, %s12
    $region7: #{tpu_custom_call.1} parent=1 // loop_footer_branch
      %11 = sbr.rel target = $region3
    $region8: #{tpu_custom_call.1} parent=1 // loop_exit
      _
    %1394 = vsyncpa [#allocation3], 1
    %s1395 = scalar_lea.sflag [#allocation3], 1
    %1396 = vsyncpa %s1395, 1

</llo_original>
